<compile_context>
chip_gen: v6e
topology: v6e:2x2x1
jax: 0.10.0
libtpu: 0.0.40
codegen_flags: <defaults>
</compile_context>

<pallas_src>
import math

import jax
import jax.numpy as jnp
from jax.experimental import pallas as pl
from jax.experimental.pallas import tpu as pltpu

K_PAD = 8      # contraction dim (state_size) padded to a sublane multiple
H_PAD = 128    # hidden / output dims padded to the lane width


def _round_up(x, m):
    return ((x + m - 1) // m) * m


def encoder_kernel(x_ref, w1_ref, b1_ref, w2_ref, b2_ref, o_ref):
    # layer 1: relu(x @ W1 + b1)  -- bf16 operands, f32 accumulation on the MXU
    h = jnp.dot(x_ref[...], w1_ref[...], preferred_element_type=jnp.float32)
    h = jnp.maximum(h + b1_ref[...], 0.0)
    # layer 2: relu(h @ W2 + b2)
    z = jnp.dot(h.astype(w2_ref.dtype), w2_ref[...],
                preferred_element_type=jnp.float32)
    z = jnp.maximum(z + b2_ref[...], 0.0)
    o_ref[...] = z.astype(o_ref.dtype)   # [TM, 128] f32 -> full unmasked stores


def encoder_pallas(x, w1, b1, w2, b2, *, max_tm=512):
    """2-layer MLP encoder on a stacked batch. x: [rows, state_size] -> [rows, fc2]."""
    rows, state_size = x.shape
    fc1 = w1.shape[1]
    fc2 = w2.shape[1]
    assert state_size <= K_PAD and fc1 <= H_PAD and fc2 <= H_PAD

    # Row tile: large when batched, shrinks (multiple of 8) for tiny inputs.
    tm = min(max_tm, _round_up(rows, 8))
    rows_pad = _round_up(rows, tm)

    # Zero padding is exact: padded x columns hit zero W1 rows; padded hidden
    # units see zero bias (ReLU(0)=0) and zero W2 rows; padded output columns
    # are sliced off below.
    x_p = jnp.zeros((rows_pad, K_PAD), jnp.bfloat16)
    x_p = x_p.at[:rows, :state_size].set(x.astype(jnp.bfloat16))
    w1_p = jnp.zeros((K_PAD, H_PAD), jnp.bfloat16)
    w1_p = w1_p.at[:state_size, :fc1].set(w1.astype(jnp.bfloat16))
    b1_p = jnp.zeros((1, H_PAD), jnp.float32).at[:, :fc1].set(b1)
    w2_p = jnp.zeros((H_PAD, H_PAD), jnp.bfloat16)
    w2_p = w2_p.at[:fc1, :fc2].set(w2.astype(jnp.bfloat16))
    b2_p = jnp.zeros((1, H_PAD), jnp.float32).at[:, :fc2].set(b2)

    grid = (rows_pad // tm,)
    out = pl.pallas_call(
        encoder_kernel,
        out_shape=jax.ShapeDtypeStruct((rows_pad, H_PAD), jnp.float32),
        grid_spec=pltpu.PrefetchScalarGridSpec(
            num_scalar_prefetch=0,
            grid=grid,
            in_specs=[
                pl.BlockSpec((tm, K_PAD), lambda i: (i, 0)),      # x tile
                pl.BlockSpec((K_PAD, H_PAD), lambda i: (0, 0)),   # W1 (resident)
                pl.BlockSpec((1, H_PAD), lambda i: (0, 0)),       # b1 (resident)
                pl.BlockSpec((H_PAD, H_PAD), lambda i: (0, 0)),   # W2 (resident)
                pl.BlockSpec((1, H_PAD), lambda i: (0, 0)),       # b2 (resident)
            ],
            out_specs=pl.BlockSpec((tm, H_PAD), lambda i: (i, 0)),
        ),
        compiler_params=pltpu.CompilerParams(
            dimension_semantics=("parallel",),   # shard rows across TCs on v7x
        ),
    )(x_p, w1_p, b1_p, w2_p, b2_p)
    return out[:rows, :fc2]


def init_linear_params(key, in_features, out_features):
    """Deterministic init mimicking torch.nn.Linear default (U[-1/sqrt(in), 1/sqrt(in)])."""
    kw, kb = jax.random.split(key)
    bound = 1.0 / math.sqrt(in_features)
    w = jax.random.uniform(kw, (in_features, out_features), jnp.float32, -bound, bound)
    b = jax.random.uniform(kb, (1, out_features), jnp.float32, -bound, bound)
    return w, b


def abstract_dqn_forward(data, params):
    """Replicates AbstractDQN.forward up to the abstract `_forward` hook:
    computes data['z'] = [encoder(s) for s in data['state']] with ONE kernel call."""
    w1, b1, w2, b2 = params
    states = data['state']
    sizes = [s.shape[0] for s in states]
    x = jnp.concatenate(states, axis=0)          # fuse the Python list loop
    z = encoder_pallas(x, w1, b1, w2, b2)
    starts = [0]
    for n in sizes[:-1]:
        starts.append(starts[-1] + n)
    data['z'] = [z[s:s + n] for s, n in zip(starts, sizes)]
    # TODO(synk): `_forward` is abstract (raises NotImplementedError) -> nothing to lower.
    return data['z']


if __name__ == "__main__":
    state_size, action_size, fc1_units, fc2_units = 4, 2, 64, 64
    batch = 8

    key = jax.random.PRNGKey(0)
    k1, k2, kx1, kx2 = jax.random.split(key, 4)

    w1, b1 = init_linear_params(k1, state_size, fc1_units)
    w2, b2 = init_linear_params(k2, fc1_units, fc2_units)
    params = (w1, b1, w2, b2)

    # data['state'] is a list of state tensors, each [batch, state_size]
    data = {
        'state': [
            jax.random.normal(kx1, (batch, state_size), jnp.float32),
            jax.random.normal(kx2, (batch, state_size), jnp.float32),
        ]
    }

    zs = abstract_dqn_forward(data, params)
    zs = [jax.block_until_ready(z) for z in zs]

    # Reference with matching bf16-operand / f32-accumulation matmuls.
    def ref_encoder(x):
        xb = x.astype(jnp.bfloat16)
        h = jnp.dot(xb, w1.astype(jnp.bfloat16),
                    preferred_element_type=jnp.float32) + b1
        h = jnp.maximum(h, 0.0)
        z = jnp.dot(h.astype(jnp.bfloat16), w2.astype(jnp.bfloat16),
                    preferred_element_type=jnp.float32) + b2
        return jnp.maximum(z, 0.0)

    # Pure f32 reference (looser tolerance; bounds bf16 rounding error).
    def ref_encoder_f32(x):
        h = jnp.maximum(x @ w1 + b1, 0.0)
        return jnp.maximum(h @ w2 + b2, 0.0)

    for s, z in zip(data['state'], zs):
        assert z.shape == (batch, fc2_units)
        assert jnp.allclose(z, ref_encoder(s), atol=1e-2, rtol=1e-2)
        assert jnp.allclose(z, ref_encoder_f32(s), atol=5e-2, rtol=5e-2)

    print("KERNEL_OK")
</pallas_src>

<mosaic_0001>
module attributes {stable_mosaic.version = 11 : i64} {
  func.func @encoder_kernel(%arg0: i32, %arg1: memref<16x8xbf16, #tpu.memory_space<vmem>>, %arg2: memref<8x128xbf16, #tpu.memory_space<vmem>>, %arg3: memref<1x128xf32, #tpu.memory_space<vmem>>, %arg4: memref<128x128xbf16, #tpu.memory_space<vmem>>, %arg5: memref<1x128xf32, #tpu.memory_space<vmem>>, %arg6: memref<16x128xf32, #tpu.memory_space<vmem>>) attributes {dimension_semantics = [#tpu.dimension_semantics<parallel>], iteration_bounds = array<i64: 1>, scalar_prefetch = 0 : i64, scratch_operands = 0 : i64, tpu.core_type = #tpu.core_type<tc>, window_params = [{transform_indices = @transform_0, window_bounds = array<i64: 16, 8>}, {pipeline_mode = #tpu.pipeline_mode<synchronous>, transform_indices = @transform_1, window_bounds = array<i64: 8, 128>}, {pipeline_mode = #tpu.pipeline_mode<synchronous>, transform_indices = @transform_2, window_bounds = array<i64: 1, 128>}, {pipeline_mode = #tpu.pipeline_mode<synchronous>, transform_indices = @transform_3, window_bounds = array<i64: 128, 128>}, {pipeline_mode = #tpu.pipeline_mode<synchronous>, transform_indices = @transform_4, window_bounds = array<i64: 1, 128>}, {transform_indices = @transform_5, window_bounds = array<i64: 16, 128>}]} {
    %c0 = arith.constant 0 : index
    %c0_0 = arith.constant 0 : index
    %0 = vector.load %arg1[%c0, %c0_0] : memref<16x8xbf16, #tpu.memory_space<vmem>>, vector<16x8xbf16>
    %c0_1 = arith.constant 0 : index
    %c0_2 = arith.constant 0 : index
    %1 = vector.load %arg2[%c0_1, %c0_2] : memref<8x128xbf16, #tpu.memory_space<vmem>>, vector<8x128xbf16>
    %cst = arith.constant dense<0.000000e+00> : vector<16x128xf32>
    %2 = tpu.matmul %0, %1, %cst {dimension_numbers = #tpu.dot_dimension_numbers<[1], [0], [0], [1], [0, 0, 1, 1], [], []>} : vector<16x8xbf16>, vector<8x128xbf16>, vector<16x128xf32> -> vector<16x128xf32>
    %c0_3 = arith.constant 0 : index
    %c0_4 = arith.constant 0 : index
    %3 = vector.load %arg3[%c0_3, %c0_4] : memref<1x128xf32, #tpu.memory_space<vmem>>, vector<1x128xf32>
    %4 = vector.broadcast %3 : vector<1x128xf32> to vector<16x128xf32>
    %5 = arith.addf %2, %4 : vector<16x128xf32>
    %cst_5 = arith.constant 0.000000e+00 : f32
    %6 = vector.broadcast %cst_5 : f32 to vector<16x128xf32>
    %7 = arith.maximumf %5, %6 : vector<16x128xf32>
    %8 = arith.truncf %7 : vector<16x128xf32> to vector<16x128xbf16>
    %c0_6 = arith.constant 0 : index
    %c0_7 = arith.constant 0 : index
    %9 = vector.load %arg4[%c0_6, %c0_7] : memref<128x128xbf16, #tpu.memory_space<vmem>>, vector<128x128xbf16>
    %cst_8 = arith.constant dense<0.000000e+00> : vector<16x128xf32>
    %10 = tpu.matmul %8, %9, %cst_8 {dimension_numbers = #tpu.dot_dimension_numbers<[1], [0], [0], [1], [0, 0, 1, 1], [], []>} : vector<16x128xbf16>, vector<128x128xbf16>, vector<16x128xf32> -> vector<16x128xf32>
    %c0_9 = arith.constant 0 : index
    %c0_10 = arith.constant 0 : index
    %11 = vector.load %arg5[%c0_9, %c0_10] : memref<1x128xf32, #tpu.memory_space<vmem>>, vector<1x128xf32>
    %12 = vector.broadcast %11 : vector<1x128xf32> to vector<16x128xf32>
    %13 = arith.addf %10, %12 : vector<16x128xf32>
    %cst_11 = arith.constant 0.000000e+00 : f32
    %14 = vector.broadcast %cst_11 : f32 to vector<16x128xf32>
    %15 = arith.maximumf %13, %14 : vector<16x128xf32>
    %c0_12 = arith.constant 0 : index
    %c0_13 = arith.constant 0 : index
    %16 = vector.load %arg6[%c0_12, %c0_13] : memref<16x128xf32, #tpu.memory_space<vmem>>, vector<16x128xf32>
    tpu.vector_store %arg6[%c0_12, %c0_13], %15 {strides = array<i32>} : memref<16x128xf32, #tpu.memory_space<vmem>>, vector<16x128xf32>,
    return
  }
  func.func @transform_0(%arg0: i32) -> (i32, i32) {
    %c0_i32 = arith.constant 0 : i32
    %c0_i32_0 = arith.constant 0 : i32
    return %arg0, %c0_i32 : i32, i32
  }
  func.func @transform_1(%arg0: i32) -> (i32, i32) {
    %c0_i32 = arith.constant 0 : i32
    %c0_i32_0 = arith.constant 0 : i32
    %c0_i32_1 = arith.constant 0 : i32
    return %c0_i32, %c0_i32_0 : i32, i32
  }
  func.func @transform_2(%arg0: i32) -> (i32, i32) {
    %c0_i32 = arith.constant 0 : i32
    %c0_i32_0 = arith.constant 0 : i32
    %c0_i32_1 = arith.constant 0 : i32
    return %c0_i32, %c0_i32_0 : i32, i32
  }
  func.func @transform_3(%arg0: i32) -> (i32, i32) {
    %c0_i32 = arith.constant 0 : i32
    %c0_i32_0 = arith.constant 0 : i32
    %c0_i32_1 = arith.constant 0 : i32
    return %c0_i32, %c0_i32_0 : i32, i32
  }
  func.func @transform_4(%arg0: i32) -> (i32, i32) {
    %c0_i32 = arith.constant 0 : i32
    %c0_i32_0 = arith.constant 0 : i32
    %c0_i32_1 = arith.constant 0 : i32
    return %c0_i32, %c0_i32_0 : i32, i32
  }
  func.func @transform_5(%arg0: i32) -> (i32, i32) {
    %c0_i32 = arith.constant 0 : i32
    %c0_i32_0 = arith.constant 0 : i32
    return %arg0, %c0_i32 : i32, i32
  }
}

</mosaic_0001>

<llo_original>
// kernel: tpu_custom_call.1
$region0: #{tpu_custom_call.1}
  #allocation0 [shape = 'u32[]', space=smem, size = 0x4, offset = 0x4, fixed_abs, tag = 'smem constant byte address 0x4 - core index']
  #allocation1 [shape = 'u32[144,128]{1,0:T(1,128)}', space=vmem, size = 0x12000, scoped, tag = 'internal scratch']
  %s0 = inlined_call_operand.vmem [shape: bf16[16,8], index: 0, kind: input, shape index: {}]
  %s1 = inlined_call_operand.vmem [shape: bf16[8,128], index: 1, kind: input, shape index: {}]
  %s2 = inlined_call_operand.vmem [shape: f32[1,128], index: 2, kind: input, shape index: {}]
  %s3 = inlined_call_operand.hbm [shape: bf16[128,128], index: 3, kind: input, shape index: {}]
  %s4 = inlined_call_operand.vmem [shape: f32[1,128], index: 4, kind: input, shape index: {}]
  %s5 = inlined_call_operand.hbm [shape: f32[16,128], index: 5, kind: output, shape index: {}]
  %s6 = sld [smem:[#allocation0]]
  $region34: #{tpu_custom_call.1} parent=0
    _
  %s8 = ssub.s32 1, %s6
  %s9 = scalar_select 0, %s8, %s6
  $region1: #{tpu_custom_call.1} parent=0
    #allocation2 [shape = 'u8[32768]{0}', space=vmem, size = 0x8000, scoped, tag = 'input window, operand 3, single buffered']
    #allocation3 [shape = 's32[1]{0}', space=sflag, size = 0x4, scoped, tag = 'scoped memory for tpu_custom_call.1']
    #allocation4 [shape = 's32[1]{0}', space=sflag, size = 0x4, scoped, tag = 'scoped memory for tpu_custom_call.1']
    #allocation5 [shape = 'u8[8192]{0}', space=vmem, size = 0x2000, scoped, tag = 'output window, operand 0, single buffered']
    %10 = vsyncpa [#allocation3], 0
    %11 = vsyncpa [#allocation4], 0
    // Predicated region
    $region2: #{tpu_custom_call.1} parent=1 // pred_check
      _
    $region3: #{tpu_custom_call.1} parent=1 // pred_check_branch
      %13 = sbr.rel (0) target = $region5
    $region4: #{tpu_custom_call.1} parent=1 // pred_region
      _
    $region5: #{tpu_custom_call.1} parent=1 // pred_fallthru
      _
    // Predicated region
    $region6: #{tpu_custom_call.1} parent=1 // pred_check
      _
    $region7: #{tpu_custom_call.1} parent=1 // pred_check_branch
      %15 = sbr.rel (0) target = $region9
    $region8: #{tpu_custom_call.1} parent=1 // pred_region
      _
    $region9: #{tpu_custom_call.1} parent=1 // pred_fallthru
      _
    // Predicated region
    $region10: #{tpu_custom_call.1} parent=1 // pred_check
      _
    $region11: #{tpu_custom_call.1} parent=1 // pred_check_branch
      %17 = sbr.rel (0) target = $region13
    $region12: #{tpu_custom_call.1} parent=1 // pred_region
      _
    $region13: #{tpu_custom_call.1} parent=1 // pred_fallthru
      _
    // Predicated region
    $region14: #{tpu_custom_call.1} parent=1 // pred_check
      _
    $region15: #{tpu_custom_call.1} parent=1 // pred_check_branch
      %19 = sbr.rel (0) target = $region17
    $region16: #{tpu_custom_call.1} parent=1 // pred_region
      %s21 = ssub.s32 1024, 1024
      %22 = vsyncadd [#allocation3], %s21
      %s23 = sshll.u32 [#allocation2], 4
      %s24 = int_to_ptr.vmem [resolvable:$true] %s23
      %29 = dma.hbm_to_vmem [thread:$0]  %s3, 1024, %s24, [#allocation3], 64, 64, 4
    $region17: #{tpu_custom_call.1} parent=1 // pred_fallthru
      _
    // Predicated region
    $region18: #{tpu_custom_call.1} parent=1 // pred_check
      _
    $region19: #{tpu_custom_call.1} parent=1 // pred_check_branch
      %31 = sbr.rel (0) target = $region21
    $region20: #{tpu_custom_call.1} parent=1 // pred_region
      _
    $region21: #{tpu_custom_call.1} parent=1 // pred_fallthru
      _
    // Predicated region
    $region22: #{tpu_custom_call.1} parent=1 // pred_check
      _
    $region23: #{tpu_custom_call.1} parent=1 // pred_check_branch
      %33 = sbr.rel (0) target = $region25
    $region24: #{tpu_custom_call.1} parent=1 // pred_region
      %34 = dma.done [#allocation3], 1024
    $region25: #{tpu_custom_call.1} parent=1 // pred_fallthru
      _
    %v36 = vld [vmem:[%s0] sm:$0xf]
    %v37 = vld [vmem:[%s0 + $0x4] sm:$0xf]
    %v38 = vld [vmem:[%s1] sm:$0xf]
    %v39 = vld [vmem:[%s2] sm:$0x1]
    %v41 = vlaneseq
    %v42 = vshrl.u32 %v41, 7
    %v43 = vsub.s32 0, %v42
    %v44 = vrot.slane %v39, %v43
    %v48 = vunpack.c.l.b16 %v36
    %v49 = vunpack.c.l.b16 %v37
    %v50 = vpack.c.b16 %v49, %v48
    %vm51 = vcmask 64512
    %v53 = vsel %vm51, %v50, 0
    %vm55 = vcmask 1043456
    %v57 = vsel %vm55, %v38, 0
    %59 = vmatprep.subr.bf16.mxu0 0
    %60 = vmatpush1.bf16.msra.mxu0 0
    %61 = vmatprep.subr.bf16.mxu0 0
    %62 = vmatpush1.bf16.msra.mxu0 0
    %63 = vmatprep.subr.bf16.mxu0 0
    %64 = vmatpush1.bf16.msra.mxu0 0
    %65 = vmatprep.subr.bf16.mxu0 0
    %66 = vmatpush1.bf16.msra.mxu0 0
    %67 = vmatprep.subr.bf16.mxu0 0
    %68 = vmatpush1.bf16.msra.mxu0 0
    %69 = vmatprep.subr.bf16.mxu0 0
    %70 = vmatpush1.bf16.msra.mxu0 0
    %71 = vmatprep.subr.bf16.mxu0 0
    %72 = vmatpush1.bf16.msra.mxu0 0
    %73 = vmatprep.subr.bf16.mxu0 0
    %74 = vmatpush1.bf16.msra.mxu0 %v57
    %75 = vmatprep.subr.bf16.mxu0 0
    %76 = vmatpush2.bf16.msra.mxu0 0
    %77 = vmatprep.subr.bf16.mxu0 0
    %78 = vmatpush2.bf16.msra.mxu0 0
    %79 = vmatprep.subr.bf16.mxu0 0
    %80 = vmatpush2.bf16.msra.mxu0 0
    %81 = vmatprep.subr.bf16.mxu0 0
    %82 = vmatpush2.bf16.msra.mxu0 0
    %83 = vmatprep.subr.bf16.mxu0 0
    %84 = vmatpush2.bf16.msra.mxu0 0
    %85 = vmatprep.subr.bf16.mxu0 0
    %86 = vmatpush2.bf16.msra.mxu0 0
    %87 = vmatprep.subr.bf16.mxu0 0
    %88 = vmatpush2.bf16.msra.mxu0 0
    %89 = vmatprep.subr.bf16.mxu0 0
    %90 = vmatpush2.bf16.msra.mxu0 0
    %91 = vmatprep.mubr.bf16.mxu0 0
    %92 = vmatmul.mubr.bf16.gmra.mxu0 %v53
    %v93 = vpop.f32.mrf.mxu0
    %v94 = vadd.f32 %v44, %v93
    %v95 = vpop.f32.mrf.mxu0
    %v96 = vpop.f32.mrf.mxu0
    %v97 = vadd.f32 %v44, %v96
    %v98 = vpop.f32.mrf.mxu0
    %99 = vdwg.mxu0
    %v100 = vmax.f32 %v94, 0.0
    %v101 = vmax.f32 %v97, 0.0
    %v102 = vpack.c.bf16 %v101, %v100
    %v103 = vld [vmem:[#allocation2] sm:$0xf]
    %v104 = vld [vmem:[#allocation2 + $0x4] sm:$0xf]
    %v105 = vld [vmem:[#allocation2 + $0x8] sm:$0xf]
    %v106 = vld [vmem:[#allocation2 + $0xc] sm:$0xf]
    %v107 = vld [vmem:[#allocation2 + $0x10] sm:$0xf]
    %v108 = vld [vmem:[#allocation2 + $0x14] sm:$0xf]
    %v109 = vld [vmem:[#allocation2 + $0x18] sm:$0xf]
    %v110 = vld [vmem:[#allocation2 + $0x1c] sm:$0xf]
    %v111 = vld [vmem:[#allocation2 + $0x20] sm:$0xf]
    %v112 = vld [vmem:[#allocation2 + $0x24] sm:$0xf]
    %v113 = vld [vmem:[#allocation2 + $0x28] sm:$0xf]
    %v114 = vld [vmem:[#allocation2 + $0x2c] sm:$0xf]
    %v115 = vld [vmem:[#allocation2 + $0x30] sm:$0xf]
    %v116 = vld [vmem:[#allocation2 + $0x34] sm:$0xf]
    %v117 = vld [vmem:[#allocation2 + $0x38] sm:$0xf]
    %v118 = vld [vmem:[#allocation2 + $0x3c] sm:$0xf]
    %v119 = vld [vmem:[%s4] sm:$0x1]
    %v121 = vlaneseq
    %v122 = vshrl.u32 %v121, 7
    %v123 = vsub.s32 0, %v122
    %v124 = vrot.slane %v119, %v123
    %v142 = vunpack.c.l.b16 %v103
    %v143 = vunpack.c.l.b16 %v104
    %v144 = vunpack.c.l.b16 %v105
    %v145 = vunpack.c.l.b16 %v106
    %v146 = vunpack.c.l.b16 %v107
    %v147 = vunpack.c.l.b16 %v108
    %v148 = vunpack.c.l.b16 %v109
    %v149 = vunpack.c.l.b16 %v110
    %v150 = vunpack.c.l.b16 %v111
    %v151 = vunpack.c.l.b16 %v112
    %v152 = vunpack.c.l.b16 %v113
    %v153 = vunpack.c.l.b16 %v114
    %v154 = vunpack.c.l.b16 %v115
    %v155 = vunpack.c.l.b16 %v116
    %v156 = vunpack.c.l.b16 %v117
    %v157 = vunpack.c.l.b16 %v118
    %v158 = vpack.c.b16 %v143, %v142
    %v159 = vpack.c.b16 %v145, %v144
    %v160 = vpack.c.b16 %v147, %v146
    %v161 = vpack.c.b16 %v149, %v148
    %v162 = vpack.c.b16 %v151, %v150
    %v163 = vpack.c.b16 %v153, %v152
    %v164 = vpack.c.b16 %v155, %v154
    %v165 = vpack.c.b16 %v157, %v156
    %174 = vmatprep.subr.bf16.mxu0 0
    %175 = vmatpush1.bf16.msra.mxu0 %v165
    %176 = vmatprep.subr.bf16.mxu0 0
    %177 = vmatpush1.bf16.msra.mxu0 %v164
    %178 = vmatprep.subr.bf16.mxu0 0
    %179 = vmatpush1.bf16.msra.mxu0 %v163
    %180 = vmatprep.subr.bf16.mxu0 0
    %181 = vmatpush1.bf16.msra.mxu0 %v162
    %182 = vmatprep.subr.bf16.mxu0 0
    %183 = vmatpush1.bf16.msra.mxu0 %v161
    %184 = vmatprep.subr.bf16.mxu0 0
    %185 = vmatpush1.bf16.msra.mxu0 %v160
    %186 = vmatprep.subr.bf16.mxu0 0
    %187 = vmatpush1.bf16.msra.mxu0 %v159
    %188 = vmatprep.subr.bf16.mxu0 0
    %189 = vmatpush1.bf16.msra.mxu0 %v158
    %190 = vmatprep.subr.bf16.mxu0 0
    %191 = vmatpush2.bf16.msra.mxu0 0
    %192 = vmatprep.subr.bf16.mxu0 0
    %193 = vmatpush2.bf16.msra.mxu0 0
    %194 = vmatprep.subr.bf16.mxu0 0
    %195 = vmatpush2.bf16.msra.mxu0 0
    %196 = vmatprep.subr.bf16.mxu0 0
    %197 = vmatpush2.bf16.msra.mxu0 0
    %198 = vmatprep.subr.bf16.mxu0 0
    %199 = vmatpush2.bf16.msra.mxu0 0
    %200 = vmatprep.subr.bf16.mxu0 0
    %201 = vmatpush2.bf16.msra.mxu0 0
    %202 = vmatprep.subr.bf16.mxu0 0
    %203 = vmatpush2.bf16.msra.mxu0 0
    %204 = vmatprep.subr.bf16.mxu0 0
    %205 = vmatpush2.bf16.msra.mxu0 0
    %206 = vmatprep.mubr.bf16.mxu0 0
    %207 = vmatmul.mubr.bf16.gmra.mxu0 %v102
    %v208 = vpop.f32.mrf.mxu0
    %v209 = vadd.f32 %v124, %v208
    %v210 = vpop.f32.mrf.mxu0
    %v211 = vpop.f32.mrf.mxu0
    %v212 = vadd.f32 %v124, %v211
    %v213 = vpop.f32.mrf.mxu0
    %214 = vdwg.mxu0
    %v215 = vmax.f32 %v209, 0.0
    %v216 = vmax.f32 %v212, 0.0
    %217 = vst [vmem:[#allocation5] sm:$0xff] %v215
    %218 = vst [vmem:[#allocation5 + $0x8] sm:$0xff] %v216
    // Predicated region
    $region26: #{tpu_custom_call.1} parent=1 // pred_check
      _
    $region27: #{tpu_custom_call.1} parent=1 // pred_check_branch
      %220 = sbr.rel (0) target = $region29
    $region28: #{tpu_custom_call.1} parent=1 // pred_region
      %s222 = ssub.s32 256, 256
      %223 = vsyncadd [#allocation4], %s222
      %s224 = sshll.u32 [#allocation5], 4
      %s225 = int_to_ptr.vmem [resolvable:$true] %s224
      %230 = dma.vmem_to_hbm [thread:$0]  %s225, 256, %s5, [#allocation4], 128, 128, 8
    $region29: #{tpu_custom_call.1} parent=1 // pred_fallthru
      _
    // Predicated region
    $region30: #{tpu_custom_call.1} parent=1 // pred_check
      _
    $region31: #{tpu_custom_call.1} parent=1 // pred_check_branch
      %232 = sbr.rel (0) target = $region33
    $region32: #{tpu_custom_call.1} parent=1 // pred_region
      %233 = dma.done [#allocation4], 256
    $region33: #{tpu_custom_call.1} parent=1 // pred_fallthru
      _
    %234 = vsyncpa [#allocation3], 1
    %235 = vsyncpa [#allocation4], 1

</llo_original>
